<compile_context>
chip_gen: v6e
topology: v6e:2x2x1
jax: 0.10.0
libtpu: 0.0.40
codegen_flags: <defaults>
</compile_context>

<pallas_src>
import functools
import math

import jax
import jax.numpy as jnp
from jax.experimental import pallas as pl
from jax.experimental.pallas import tpu as pltpu

EPS = 1e-5              # nn.BatchNorm1d default eps
VMEM_LIMIT = 32 << 20   # explicit scoped-VMEM budget (safe on v5e/v6e/v7x)


# ----------------------------------------------------------------------------
# Kernels
# ----------------------------------------------------------------------------
def _fused_hidden_kernel(true_batch, block_batch, ragged,
                         x_ref, wa_ref, ba_ref, w2_ref, b2_ref,
                         h2_ref, sum_ref, ssq_ref):
    """h2 = relu(x @ W_A + b_A) @ W2 + b2 (BN0/Linear1/BN1 folded into W_A,b_A)
    plus per-core whole-batch sum / sum-sq of h2 for BN2."""
    @pl.when(pl.program_id(1) == 0)
    def _():
        sum_ref[...] = jnp.zeros_like(sum_ref)
        ssq_ref[...] = jnp.zeros_like(ssq_ref)

    x = x_ref[...].astype(wa_ref.dtype)
    h1n = jnp.dot(x, wa_ref[...], preferred_element_type=jnp.float32) + ba_ref[...]
    r1 = jnp.maximum(h1n, 0.0)
    h2 = jnp.dot(r1.astype(w2_ref.dtype), w2_ref[...],
                 preferred_element_type=jnp.float32) + b2_ref[...]
    h2_ref[...] = h2.astype(h2_ref.dtype)

    if ragged:
        # Pad rows of the last (ragged) tile must not pollute whole-batch stats.
        tile = pl.program_id(0) * pl.num_programs(1) + pl.program_id(1)
        rows = tile * block_batch + jax.lax.broadcasted_iota(jnp.int32, h2.shape, 0)
        h2 = jnp.where(rows < true_batch, h2, 0.0)

    sum_ref[...] += jnp.sum(h2, axis=0, keepdims=True)[None]
    ssq_ref[...] += jnp.sum(h2 * h2, axis=0, keepdims=True)[None]


def _final_kernel(h_ref, s_ref, t_ref, w_ref, b_ref, out_ref):
    """relu(BN2(h2)) @ W3 + b3 — writes the true-width output (no pad/slice)."""
    a = jnp.maximum(h_ref[...].astype(jnp.float32) * s_ref[...] + t_ref[...], 0.0)
    out_ref[...] = (jnp.dot(a.astype(w_ref.dtype), w_ref[...],
                            preferred_element_type=jnp.float32)
                    + b_ref[...]).astype(out_ref.dtype)


# ----------------------------------------------------------------------------
# pallas_call wrappers
# ----------------------------------------------------------------------------
def _resident(arr):
    """Full-shape block with a constant index map: stays VMEM-resident across
    all grid steps (weights / per-feature affine vectors / biases)."""
    nd = arr.ndim
    return pl.BlockSpec(arr.shape, lambda *_, _nd=nd: (0,) * _nd)


def _pick_tile(batch, requested, cap, align):
    """Largest batch tile <= cap; either the whole batch or align-multiple rows
    (ragged last tiles are handled with in-kernel masking / dropped OOB writes)."""
    tb = min(batch, cap) if requested is None else min(int(requested), batch, cap)
    if tb != batch:
        tb = max(align, (tb // align) * align)
    return min(tb, batch)


def _run_fused_hidden(x, w_a, b_a, w2, b2, *, block_batch, hidden_dtype):
    batch, e = x.shape
    l = w2.shape[1]
    n_tiles = pl.cdiv(batch, block_batch)
    nc = 2 if n_tiles % 2 == 0 else 1        # per-core partials (v7x megacore)
    tpc = n_tiles // nc
    ragged = (batch % block_batch) != 0
    idx = lambda c, i: (c * tpc + i, 0)

    wbytes = jnp.dtype(w_a.dtype).itemsize
    bytes_accessed = int(x.nbytes + batch * l * jnp.dtype(hidden_dtype).itemsize
                         + (e * l + l * l) * wbytes + 2 * l * 4 + 2 * nc * l * 4)
    kernel = functools.partial(_fused_hidden_kernel, batch, block_batch, ragged)
    return pl.pallas_call(
        kernel,
        out_shape=(
            jax.ShapeDtypeStruct((batch, l), hidden_dtype),      # h2 (bf16)
            jax.ShapeDtypeStruct((nc, 1, l), jnp.float32),        # per-core sum
            jax.ShapeDtypeStruct((nc, 1, l), jnp.float32),        # per-core sumsq
        ),
        grid=(nc, tpc),
        in_specs=[
            pl.BlockSpec((block_batch, e), idx),
            _resident(w_a), _resident(b_a), _resident(w2), _resident(b2),
        ],
        out_specs=(
            pl.BlockSpec((block_batch, l), idx),
            pl.BlockSpec((1, 1, l), lambda c, i: (c, 0, 0)),
            pl.BlockSpec((1, 1, l), lambda c, i: (c, 0, 0)),
        ),
        compiler_params=pltpu.CompilerParams(
            dimension_semantics=("parallel", "arbitrary"),
            vmem_limit_bytes=VMEM_LIMIT),
        cost_estimate=pl.CostEstimate(
            flops=2 * batch * l * (e + l), transcendentals=0,
            bytes_accessed=bytes_accessed),
    )(x, w_a, b_a, w2, b2)


def _run_final(h2, s2, t2, w3, b3, *, block_batch, out_dtype):
    batch, l = h2.shape
    d = w3.shape[1]
    n_tiles = pl.cdiv(batch, block_batch)
    wbytes = jnp.dtype(w3.dtype).itemsize
    bytes_accessed = int(h2.nbytes + batch * d * jnp.dtype(out_dtype).itemsize
                         + l * d * wbytes + d * 4 + 2 * l * 4)
    return pl.pallas_call(
        _final_kernel,
        out_shape=jax.ShapeDtypeStruct((batch, d), out_dtype),
        grid=(n_tiles,),
        in_specs=[
            pl.BlockSpec((block_batch, l), lambda i: (i, 0)),
            _resident(s2), _resident(t2), _resident(w3), _resident(b3),
        ],
        out_specs=pl.BlockSpec((block_batch, d), lambda i: (i, 0)),
        compiler_params=pltpu.CompilerParams(
            dimension_semantics=("parallel",),
            vmem_limit_bytes=VMEM_LIMIT),
        cost_estimate=pl.CostEstimate(
            flops=2 * batch * l * d, transcendentals=0,
            bytes_accessed=bytes_accessed),
    )(h2, s2, t2, w3, b3)


# ----------------------------------------------------------------------------
# Forward pass
# ----------------------------------------------------------------------------
def decoder_forward(x, params, data_shape=(1, 28, 28), uniform_stdev=0.05,
                    hidden_block=None, final_block=None,
                    weights_dtype=jnp.bfloat16, hidden_dtype=jnp.bfloat16,
                    out_dtype=jnp.float32):
    x = x.astype(jnp.float32)
    batch = x.shape[0]
    d = math.prod(data_shape)

    w1, b1 = params["w1"], params["b1"]
    w2, b2 = params["w2"], params["b2"]
    w3, b3 = params["w3"], params["b3"]

    # ---- BN0 and BN1 folded analytically in the wrapper (x is tiny: B x E) --
    # h1 = BN0(x) @ W1 + b1 is affine in x, so BN1's whole-batch mean/variance
    # follow exactly from the first two moments of x (no h1 materialization).
    mu0 = jnp.mean(x, axis=0, keepdims=True)                   # (1, E)
    xc = x - mu0
    cov0 = xc.T @ xc / batch                                   # (E, E), biased
    var0 = jnp.diagonal(cov0)[None, :]                         # (1, E)
    s0 = params["g0"] * jax.lax.rsqrt(var0 + EPS)
    t0 = params["bt0"] - mu0 * s0

    mu1 = (mu0 * s0 + t0) @ w1 + b1                            # (1, L)
    cov_a = cov0 * (s0.T * s0)                                 # Cov(BN0(x))
    var1 = jnp.maximum(jnp.sum((cov_a @ w1) * w1, axis=0, keepdims=True), 0.0)
    s1 = params["g1"] * jax.lax.rsqrt(var1 + EPS)
    t1 = params["bt1"] - mu1 * s1

    # Fold BN0 -> Linear1 -> BN1 into a single affine  x @ W_A + b_A.
    w_a = (s0.T * w1) * s1                                     # (E, L)
    b_a = (t0 @ w1 + b1) * s1 + t1                             # (1, L)

    align_h = 16 if jnp.dtype(hidden_dtype).itemsize < 4 else 8
    tb_h = _pick_tile(batch, hidden_block, 4096, align_h)
    tb_f = _pick_tile(batch, final_block, 2048, 8)

    # Stage 1 (fused A+B): h2 = relu(x @ W_A + b_A) @ W2 + b2 + BN2 partials.
    h2, sum2, ssq2 = _run_fused_hidden(
        x, w_a.astype(weights_dtype), b_a, w2.astype(weights_dtype), b2,
        block_batch=tb_h, hidden_dtype=hidden_dtype)

    mu2 = jnp.sum(sum2, axis=0) / batch                        # (1, L)
    var2 = jnp.maximum(jnp.sum(ssq2, axis=0) / batch - mu2 * mu2, 0.0)
    s2 = params["g2"] * jax.lax.rsqrt(var2 + EPS)
    t2 = params["bt2"] - mu2 * s2

    # Stage 2: relu(BN2(h2)) @ W3 + b3, written at the true width (no slice).
    out = _run_final(h2, s2, t2, w3.astype(weights_dtype), b3,
                     block_batch=tb_f, out_dtype=out_dtype)

    mean = out.reshape((batch,) + tuple(data_shape))
    # Constant stdev: broadcast, don't burn HBM bandwidth on a fill kernel.
    stdev = jnp.broadcast_to(jnp.asarray(uniform_stdev, mean.dtype), mean.shape)
    return mean, stdev


# ----------------------------------------------------------------------------
# Pure-JAX reference (mirrors the PyTorch module) and parameter init
# ----------------------------------------------------------------------------
def decoder_reference(x, params, data_shape=(1, 28, 28), uniform_stdev=0.05):
    def bn(h, g, b):
        mu = jnp.mean(h, axis=0, keepdims=True)
        var = jnp.mean(jnp.square(h - mu), axis=0, keepdims=True)
        return (h - mu) * jax.lax.rsqrt(var + EPS) * g + b

    x = x.astype(jnp.float32)
    h = bn(x, params["g0"], params["bt0"])
    h = jnp.dot(h, params["w1"]) + params["b1"]
    h = jnp.maximum(bn(h, params["g1"], params["bt1"]), 0.0)
    h = jnp.dot(h, params["w2"]) + params["b2"]
    h = jnp.maximum(bn(h, params["g2"], params["bt2"]), 0.0)
    h = jnp.dot(h, params["w3"]) + params["b3"]
    mean = h.reshape((x.shape[0],) + tuple(data_shape))
    return mean, uniform_stdev + jnp.zeros_like(mean)


def init_decoder_params(key, embedding_dim=10, layer_dim=128, data_numel=784):
    ks = jax.random.split(key, 6)

    def lin(kw, kb, fan_in, fan_out):
        bound = 1.0 / math.sqrt(fan_in)
        w = jax.random.uniform(kw, (fan_in, fan_out), jnp.float32, -bound, bound)
        b = jax.random.uniform(kb, (1, fan_out), jnp.float32, -bound, bound)
        return w, b

    params = {
        "g0": jnp.ones((1, embedding_dim), jnp.float32),
        "bt0": jnp.zeros((1, embedding_dim), jnp.float32),
        "g1": jnp.ones((1, layer_dim), jnp.float32),
        "bt1": jnp.zeros((1, layer_dim), jnp.float32),
        "g2": jnp.ones((1, layer_dim), jnp.float32),
        "bt2": jnp.zeros((1, layer_dim), jnp.float32),
    }
    params["w1"], params["b1"] = lin(ks[0], ks[1], embedding_dim, layer_dim)
    params["w2"], params["b2"] = lin(ks[2], ks[3], layer_dim, layer_dim)
    params["w3"], params["b3"] = lin(ks[4], ks[5], layer_dim, data_numel)
    return params


# ----------------------------------------------------------------------------
if __name__ == "__main__":
    import numpy as np

    EMBED, LAYER, DATA_SHAPE = 10, 128, (1, 28, 28)
    key = jax.random.PRNGKey(0)
    k_x, k_p = jax.random.split(key)
    params = init_decoder_params(k_p, EMBED, LAYER, math.prod(DATA_SHAPE))

    def check(x, tol, **kw):
        mean, stdev = decoder_forward(x, params, DATA_SHAPE, 0.05, **kw)
        jax.block_until_ready((mean, stdev))
        ref_mean, ref_stdev = decoder_reference(x, params, DATA_SHAPE, 0.05)
        assert mean.shape == (x.shape[0],) + DATA_SHAPE
        assert stdev.shape == mean.shape
        np.testing.assert_allclose(np.asarray(mean), np.asarray(ref_mean),
                                   rtol=tol, atol=tol)
        np.testing.assert_allclose(np.asarray(stdev), np.asarray(ref_stdev),
                                   rtol=0, atol=1e-6)

    # 1) Small batch, single tile per stage, full-f32 exact-parity path.
    x8 = jax.random.normal(k_x, (8, EMBED), jnp.float32)
    check(x8, 2e-2, weights_dtype=jnp.float32, hidden_dtype=jnp.float32)

    # 2) Batch-tiled path with an even tile count (exercises the per-core
    #    "parallel" stat-accumulator axis); f32 weights, bf16 h2 intermediate.
    x32 = jax.random.normal(jax.random.fold_in(k_x, 1), (32, EMBED), jnp.float32)
    check(x32, 3e-2, weights_dtype=jnp.float32, hidden_block=16, final_block=16)

    # 3) Ragged last tile (B=24, tile=16): pad rows are masked out of BN2 stats
    #    and out-of-bounds output rows are dropped.
    x24 = jax.random.normal(jax.random.fold_in(k_x, 2), (24, EMBED), jnp.float32)
    check(x24, 3e-2, weights_dtype=jnp.float32, hidden_block=16, final_block=16)

    # 4) Default fast path: bf16 weights + bf16 intermediate (loose tolerance).
    check(x32, 1.5e-1)

    print("KERNEL_OK")
</pallas_src>

<mosaic_0001>
module attributes {stable_mosaic.version = 11 : i64} {
  func.func @_fused_hidden_kernel(%arg0: i32, %arg1: i32, %arg2: memref<8x10xf32, #tpu.memory_space<vmem>>, %arg3: memref<10x128xf32, #tpu.memory_space<vmem>>, %arg4: memref<1x128xf32, #tpu.memory_space<vmem>>, %arg5: memref<128x128xf32, #tpu.memory_space<vmem>>, %arg6: memref<1x128xf32, #tpu.memory_space<vmem>>, %arg7: memref<8x128xf32, #tpu.memory_space<vmem>>, %arg8: memref<1x1x128xf32, #tpu.memory_space<vmem>>, %arg9: memref<1x1x128xf32, #tpu.memory_space<vmem>>) attributes {dimension_semantics = [#tpu.dimension_semantics<parallel>, #tpu.dimension_semantics<arbitrary>], iteration_bounds = array<i64: 1, 1>, scalar_prefetch = 0 : i64, scratch_operands = 0 : i64, tpu.core_type = #tpu.core_type<tc>, window_params = [{transform_indices = @transform_0, window_bounds = array<i64: 8, 10>}, {pipeline_mode = #tpu.pipeline_mode<synchronous>, transform_indices = @transform_1, window_bounds = array<i64: 10, 128>}, {pipeline_mode = #tpu.pipeline_mode<synchronous>, transform_indices = @transform_2, window_bounds = array<i64: 1, 128>}, {pipeline_mode = #tpu.pipeline_mode<synchronous>, transform_indices = @transform_3, window_bounds = array<i64: 128, 128>}, {pipeline_mode = #tpu.pipeline_mode<synchronous>, transform_indices = @transform_4, window_bounds = array<i64: 1, 128>}, {transform_indices = @transform_5, window_bounds = array<i64: 8, 128>}, {transform_indices = @transform_6, window_bounds = array<i64: 1, 1, 128>}, {transform_indices = @transform_7, window_bounds = array<i64: 1, 1, 128>}]} {
    %c0_i32 = arith.constant 0 : i32
    %0 = arith.cmpi eq, %arg1, %c0_i32 : i32
    %1 = arith.extui %0 : i1 to i32
    %c0_i32_0 = arith.constant 0 : i32
    %2 = arith.cmpi ne, %1, %c0_i32_0 : i32
    scf.if %2 {
      %cst_28 = arith.constant 0.000000e+00 : f32
      %30 = vector.broadcast %cst_28 : f32 to vector<1x1x128xf32>
      %c0_29 = arith.constant 0 : index
      %c0_30 = arith.constant 0 : index
      %c0_31 = arith.constant 0 : index
      %31 = vector.load %arg8[%c0_29, %c0_30, %c0_31] : memref<1x1x128xf32, #tpu.memory_space<vmem>>, vector<1x1x128xf32>
      tpu.vector_store %arg8[%c0_29, %c0_30, %c0_31], %30 {strides = array<i32>} : memref<1x1x128xf32, #tpu.memory_space<vmem>>, vector<1x1x128xf32>,
      %cst_32 = arith.constant 0.000000e+00 : f32
      %32 = vector.broadcast %cst_32 : f32 to vector<1x1x128xf32>
      %c0_33 = arith.constant 0 : index
      %c0_34 = arith.constant 0 : index
      %c0_35 = arith.constant 0 : index
      %33 = vector.load %arg9[%c0_33, %c0_34, %c0_35] : memref<1x1x128xf32, #tpu.memory_space<vmem>>, vector<1x1x128xf32>
      tpu.vector_store %arg9[%c0_33, %c0_34, %c0_35], %32 {strides = array<i32>} : memref<1x1x128xf32, #tpu.memory_space<vmem>>, vector<1x1x128xf32>,
    } else {
    }
    %c0 = arith.constant 0 : index
    %c0_1 = arith.constant 0 : index
    %3 = vector.load %arg2[%c0, %c0_1] : memref<8x10xf32, #tpu.memory_space<vmem>>, vector<8x10xf32>
    %c0_2 = arith.constant 0 : index
    %c0_3 = arith.constant 0 : index
    %4 = vector.load %arg3[%c0_2, %c0_3] : memref<10x128xf32, #tpu.memory_space<vmem>>, vector<10x128xf32>
    %cst = arith.constant dense<0.000000e+00> : vector<8x128xf32>
    %5 = tpu.matmul %3, %4, %cst {dimension_numbers = #tpu.dot_dimension_numbers<[1], [0], [0], [1], [0, 0, 1, 1], [], []>} : vector<8x10xf32>, vector<10x128xf32>, vector<8x128xf32> -> vector<8x128xf32>
    %c0_4 = arith.constant 0 : index
    %c0_5 = arith.constant 0 : index
    %6 = vector.load %arg4[%c0_4, %c0_5] : memref<1x128xf32, #tpu.memory_space<vmem>>, vector<1x128xf32>
    %7 = vector.broadcast %6 : vector<1x128xf32> to vector<8x128xf32>
    %8 = arith.addf %5, %7 : vector<8x128xf32>
    %cst_6 = arith.constant 0.000000e+00 : f32
    %9 = vector.broadcast %cst_6 : f32 to vector<8x128xf32>
    %10 = arith.maximumf %8, %9 : vector<8x128xf32>
    %c0_7 = arith.constant 0 : index
    %c0_8 = arith.constant 0 : index
    %11 = vector.load %arg5[%c0_7, %c0_8] : memref<128x128xf32, #tpu.memory_space<vmem>>, vector<128x128xf32>
    %cst_9 = arith.constant dense<0.000000e+00> : vector<8x128xf32>
    %12 = tpu.matmul %10, %11, %cst_9 {dimension_numbers = #tpu.dot_dimension_numbers<[1], [0], [0], [1], [0, 0, 1, 1], [], []>} : vector<8x128xf32>, vector<128x128xf32>, vector<8x128xf32> -> vector<8x128xf32>
    %c0_10 = arith.constant 0 : index
    %c0_11 = arith.constant 0 : index
    %13 = vector.load %arg6[%c0_10, %c0_11] : memref<1x128xf32, #tpu.memory_space<vmem>>, vector<1x128xf32>
    %14 = vector.broadcast %13 : vector<1x128xf32> to vector<8x128xf32>
    %15 = arith.addf %12, %14 : vector<8x128xf32>
    %c0_12 = arith.constant 0 : index
    %c0_13 = arith.constant 0 : index
    %16 = vector.load %arg7[%c0_12, %c0_13] : memref<8x128xf32, #tpu.memory_space<vmem>>, vector<8x128xf32>
    tpu.vector_store %arg7[%c0_12, %c0_13], %15 {strides = array<i32>} : memref<8x128xf32, #tpu.memory_space<vmem>>, vector<8x128xf32>,
    %c0_14 = arith.constant 0 : index
    %c0_15 = arith.constant 0 : index
    %c0_16 = arith.constant 0 : index
    %17 = vector.load %arg8[%c0_14, %c0_15, %c0_16] : memref<1x1x128xf32, #tpu.memory_space<vmem>>, vector<1x1x128xf32>
    %cst_17 = arith.constant dense<0.000000e+00> : vector<128xf32>
    %18 = vector.multi_reduction <add>, %15, %cst_17 [0] : vector<8x128xf32> to vector<128xf32>
    %19 = vector.shape_cast %18 : vector<128xf32> to vector<1x128xf32>
    %20 = vector.shape_cast %19 : vector<1x128xf32> to vector<1x1x128xf32>
    %21 = arith.addf %17, %20 : vector<1x1x128xf32>
    %c0_18 = arith.constant 0 : index
    %c0_19 = arith.constant 0 : index
    %c0_20 = arith.constant 0 : index
    %22 = vector.load %arg8[%c0_18, %c0_19, %c0_20] : memref<1x1x128xf32, #tpu.memory_space<vmem>>, vector<1x1x128xf32>
    tpu.vector_store %arg8[%c0_18, %c0_19, %c0_20], %21 {strides = array<i32>} : memref<1x1x128xf32, #tpu.memory_space<vmem>>, vector<1x1x128xf32>,
    %c0_21 = arith.constant 0 : index
    %c0_22 = arith.constant 0 : index
    %c0_23 = arith.constant 0 : index
    %23 = vector.load %arg9[%c0_21, %c0_22, %c0_23] : memref<1x1x128xf32, #tpu.memory_space<vmem>>, vector<1x1x128xf32>
    %24 = arith.mulf %15, %15 : vector<8x128xf32>
    %cst_24 = arith.constant dense<0.000000e+00> : vector<128xf32>
    %25 = vector.multi_reduction <add>, %24, %cst_24 [0] : vector<8x128xf32> to vector<128xf32>
    %26 = vector.shape_cast %25 : vector<128xf32> to vector<1x128xf32>
    %27 = vector.shape_cast %26 : vector<1x128xf32> to vector<1x1x128xf32>
    %28 = arith.addf %23, %27 : vector<1x1x128xf32>
    %c0_25 = arith.constant 0 : index
    %c0_26 = arith.constant 0 : index
    %c0_27 = arith.constant 0 : index
    %29 = vector.load %arg9[%c0_25, %c0_26, %c0_27] : memref<1x1x128xf32, #tpu.memory_space<vmem>>, vector<1x1x128xf32>
    tpu.vector_store %arg9[%c0_25, %c0_26, %c0_27], %28 {strides = array<i32>} : memref<1x1x128xf32, #tpu.memory_space<vmem>>, vector<1x1x128xf32>,
    return
  }
  func.func @transform_0(%arg0: i32, %arg1: i32) -> (i32, i32) {
    %c1_i32 = arith.constant 1 : i32
    %0 = arith.muli %arg0, %c1_i32 : i32
    %1 = arith.addi %0, %arg1 : i32
    %c0_i32 = arith.constant 0 : i32
    %c0_i32_0 = arith.constant 0 : i32
    return %1, %c0_i32 : i32, i32
  }
  func.func @transform_1(%arg0: i32, %arg1: i32) -> (i32, i32) {
    %c0_i32 = arith.constant 0 : i32
    %c0_i32_0 = arith.constant 0 : i32
    %c0_i32_1 = arith.constant 0 : i32
    return %c0_i32, %c0_i32_0 : i32, i32
  }
  func.func @transform_2(%arg0: i32, %arg1: i32) -> (i32, i32) {
    %c0_i32 = arith.constant 0 : i32
    %c0_i32_0 = arith.constant 0 : i32
    %c0_i32_1 = arith.constant 0 : i32
    return %c0_i32, %c0_i32_0 : i32, i32
  }
  func.func @transform_3(%arg0: i32, %arg1: i32) -> (i32, i32) {
    %c0_i32 = arith.constant 0 : i32
    %c0_i32_0 = arith.constant 0 : i32
    %c0_i32_1 = arith.constant 0 : i32
    return %c0_i32, %c0_i32_0 : i32, i32
  }
  func.func @transform_4(%arg0: i32, %arg1: i32) -> (i32, i32) {
    %c0_i32 = arith.constant 0 : i32
    %c0_i32_0 = arith.constant 0 : i32
    %c0_i32_1 = arith.constant 0 : i32
    return %c0_i32, %c0_i32_0 : i32, i32
  }
  func.func @transform_5(%arg0: i32, %arg1: i32) -> (i32, i32) {
    %c1_i32 = arith.constant 1 : i32
    %0 = arith.muli %arg0, %c1_i32 : i32
    %1 = arith.addi %0, %arg1 : i32
    %c0_i32 = arith.constant 0 : i32
    %c0_i32_0 = arith.constant 0 : i32
    return %1, %c0_i32 : i32, i32
  }
  func.func @transform_6(%arg0: i32, %arg1: i32) -> (i32, i32, i32) {
    %c0_i32 = arith.constant 0 : i32
    %c0_i32_0 = arith.constant 0 : i32
    %c0_i32_1 = arith.constant 0 : i32
    return %arg0, %c0_i32, %c0_i32_0 : i32, i32, i32
  }
  func.func @transform_7(%arg0: i32, %arg1: i32) -> (i32, i32, i32) {
    %c0_i32 = arith.constant 0 : i32
    %c0_i32_0 = arith.constant 0 : i32
    %c0_i32_1 = arith.constant 0 : i32
    return %arg0, %c0_i32, %c0_i32_0 : i32, i32, i32
  }
}

</mosaic_0001>

<llo_original>
// kernel: tpu_custom_call.1
$region0: #{tpu_custom_call.1}
  #allocation0 [shape = 'u32[]', space=smem, size = 0x4, offset = 0x4, fixed_abs, tag = 'smem constant byte address 0x4 - core index']
  #allocation1 [shape = 'u32[144,128]{1,0:T(1,128)}', space=vmem, size = 0x12000, scoped, tag = 'internal scratch']
  %s0 = inlined_call_operand.hbm [shape: f32[8,10], index: 0, kind: input, shape index: {}]
  %s1 = inlined_call_operand.hbm [shape: f32[10,128], index: 1, kind: input, shape index: {}]
  %s2 = inlined_call_operand.vmem [shape: f32[1,128], index: 2, kind: input, shape index: {}]
  %s3 = inlined_call_operand.hbm [shape: f32[128,128], index: 3, kind: input, shape index: {}]
  %s4 = inlined_call_operand.vmem [shape: f32[1,128], index: 4, kind: input, shape index: {}]
  %s5 = inlined_call_operand.hbm [shape: f32[8,128], index: 5, kind: output, shape index: {0}]
  %s6 = inlined_call_operand.hbm [shape: f32[1,1,128], index: 6, kind: output, shape index: {1}]
  %s7 = inlined_call_operand.hbm [shape: f32[1,1,128], index: 7, kind: output, shape index: {2}]
  %8 = xla_tuple %s5, %s6, %s7
  %s9 = sld [smem:[#allocation0]]
  $region62: #{tpu_custom_call.1} parent=0
    _
  %s11 = ssub.s32 1, %s9
  %s12 = scalar_select 0, %s11, %s9
  $region1: #{tpu_custom_call.1} parent=0
    #allocation2 [shape = 'u8[4096]{0}', space=vmem, size = 0x1000, scoped, tag = 'input window, operand 0, single buffered']
    #allocation3 [shape = 's32[1]{0}', space=sflag, size = 0x4, scoped, tag = 'scoped memory for tpu_custom_call.1']
    #allocation4 [shape = 's32[1]{0}', space=sflag, size = 0x4, scoped, tag = 'scoped memory for tpu_custom_call.1']
    #allocation5 [shape = 'u8[8192]{0}', space=vmem, size = 0x2000, scoped, tag = 'input window, operand 1, single buffered']
    #allocation6 [shape = 's32[1]{0}', space=sflag, size = 0x4, scoped, tag = 'scoped memory for tpu_custom_call.1']
    #allocation7 [shape = 'u8[65536]{0}', space=vmem, size = 0x10000, scoped, tag = 'input window, operand 3, single buffered']
    #allocation8 [shape = 'u8[4096]{0}', space=vmem, size = 0x1000, scoped, tag = 'output window, operand 0, single buffered']
    #allocation9 [shape = 'u8[512]{0}', space=vmem, size = 0x400, scoped, tag = 'output window, operand 1, single buffered']
    #allocation10 [shape = 's32[1]{0}', space=sflag, size = 0x4, scoped, tag = 'scoped memory for tpu_custom_call.1']
    #allocation11 [shape = 'u8[512]{0}', space=vmem, size = 0x400, scoped, tag = 'output window, operand 2, single buffered']
    %13 = vsyncpa [#allocation3], 0
    %14 = vsyncpa [#allocation6], 0
    %15 = vsyncpa [#allocation4], 0
    %16 = vsyncpa [#allocation10], 0
    // Predicated region
    $region2: #{tpu_custom_call.1} parent=1 // pred_check
      _
    $region3: #{tpu_custom_call.1} parent=1 // pred_check_branch
      %18 = sbr.rel (0) target = $region5
    $region4: #{tpu_custom_call.1} parent=1 // pred_region
      %s19 = sadd.s32 0, 0
      %s21 = ssub.s32 128, 128
      %22 = vsyncadd [#allocation3], %s21
      %s23 = smul.addr %s19, 128
      %s24 = scalar_lea.hbm %s0, %s23
      %s26 = sshll.u32 [#allocation2], 4
      %s27 = int_to_ptr.vmem [resolvable:$true] %s26
      %29 = dma.hbm_to_vmem [thread:$0]  %s24, 128, %s27, [#allocation3]
    $region5: #{tpu_custom_call.1} parent=1 // pred_fallthru
      _
    // Predicated region
    $region6: #{tpu_custom_call.1} parent=1 // pred_check
      _
    $region7: #{tpu_custom_call.1} parent=1 // pred_check_branch
      %31 = sbr.rel (0) target = $region9
    $region8: #{tpu_custom_call.1} parent=1 // pred_region
      %s33 = ssub.s32 256, 256
      %34 = vsyncadd [#allocation6], %s33
      %s35 = sshll.u32 [#allocation5], 4
      %s36 = int_to_ptr.vmem [resolvable:$true] %s35
      %41 = dma.hbm_to_vmem [thread:$0]  %s1, 256, %s36, [#allocation6], 128, 128, 8
    $region9: #{tpu_custom_call.1} parent=1 // pred_fallthru
      _
    // Predicated region
    $region10: #{tpu_custom_call.1} parent=1 // pred_check
      _
    $region11: #{tpu_custom_call.1} parent=1 // pred_check_branch
      %43 = sbr.rel (0) target = $region13
    $region12: #{tpu_custom_call.1} parent=1 // pred_region
      _
    $region13: #{tpu_custom_call.1} parent=1 // pred_fallthru
      _
    // Predicated region
    $region14: #{tpu_custom_call.1} parent=1 // pred_check
      _
    $region15: #{tpu_custom_call.1} parent=1 // pred_check_branch
      %45 = sbr.rel (0) target = $region17
    $region16: #{tpu_custom_call.1} parent=1 // pred_region
      %s47 = ssub.s32 2048, 2048
      %48 = vsyncadd [#allocation6], %s47
      %s49 = sshll.u32 [#allocation7], 4
      %s50 = int_to_ptr.vmem [resolvable:$true] %s49
      %55 = dma.hbm_to_vmem [thread:$0]  %s3, 2048, %s50, [#allocation6], 128, 128, 8
    $region17: #{tpu_custom_call.1} parent=1 // pred_fallthru
      _
    // Predicated region
    $region18: #{tpu_custom_call.1} parent=1 // pred_check
      _
    $region19: #{tpu_custom_call.1} parent=1 // pred_check_branch
      %57 = sbr.rel (0) target = $region21
    $region20: #{tpu_custom_call.1} parent=1 // pred_region
      _
    $region21: #{tpu_custom_call.1} parent=1 // pred_fallthru
      _
    // Predicated region
    $region22: #{tpu_custom_call.1} parent=1 // pred_check
      _
    $region23: #{tpu_custom_call.1} parent=1 // pred_check_branch
      %59 = sbr.rel (0) target = $region25
    $region24: #{tpu_custom_call.1} parent=1 // pred_region
      %60 = dma.done [#allocation3], 128
    $region25: #{tpu_custom_call.1} parent=1 // pred_fallthru
      _
    // Predicated region
    $region26: #{tpu_custom_call.1} parent=1 // pred_check
      _
    $region27: #{tpu_custom_call.1} parent=1 // pred_check_branch
      %62 = sbr.rel (0) target = $region29
    $region28: #{tpu_custom_call.1} parent=1 // pred_region
      %63 = dma.done [#allocation6], 256
    $region29: #{tpu_custom_call.1} parent=1 // pred_fallthru
      _
    // Predicated region
    $region30: #{tpu_custom_call.1} parent=1 // pred_check
      _
    $region31: #{tpu_custom_call.1} parent=1 // pred_check_branch
      %65 = sbr.rel (0) target = $region33
    $region32: #{tpu_custom_call.1} parent=1 // pred_region
      %66 = dma.done [#allocation6], 2048
    $region33: #{tpu_custom_call.1} parent=1 // pred_fallthru
      _
    %s67 = sadd.s32 0, 0
    %s68 = sadd.s32 0, 0
    %p69 = scmp.eq.s32.totalorder 0, 0
    // Predicated region
    $region34: #{tpu_custom_call.1} parent=1 // pred_check
      %p70 = pneg %p69
    $region35: #{tpu_custom_call.1} parent=1 // pred_check_branch
      %72 = sbr.rel (%p70) target = $region37
    $region36: #{tpu_custom_call.1} parent=1 // pred_region
      %73 = vst [vmem:[#allocation9] sm:$0x1] 0.0
      %74 = vst [vmem:[#allocation11] sm:$0x1] 0.0
    $region37: #{tpu_custom_call.1} parent=1 // pred_fallthru
      _
    %v75 = vld [vmem:[#allocation2] sm:$0xff]
    %v76 = vld [vmem:[#allocation5] sm:$0xff]
    %v77 = vld [vmem:[#allocation5 + $0x8] sm:$0x3]
    %v78 = vld [vmem:[%s2] sm:$0x1]
    %v80 = vlaneseq
    %v81 = vshrl.u32 %v80, 7
    %v82 = vsub.s32 0, %v81
    %v83 = vrot.slane %v78, %v82
    %vm85 = vcmask 80896
    %v87 = vsel %vm85, %v75, 0
    %vm89 = vcmask 1041408
    %v91 = vsel %vm89, %v77, 0
    %93 = vmatprep.subr.mxu0 0.0
    %94 = vmatpush1.msra.mxu0 0.0
    %95 = vmatprep.subr.mxu0 0.0
    %96 = vmatpush1.msra.mxu0 0.0
    %97 = vmatprep.subr.mxu0 0.0
    %98 = vmatpush1.msra.mxu0 0.0
    %99 = vmatprep.subr.mxu0 0.0
    %100 = vmatpush1.msra.mxu0 0.0
    %101 = vmatprep.subr.mxu0 0.0
    %102 = vmatpush1.msra.mxu0 0.0
    %103 = vmatprep.subr.mxu0 0.0
    %104 = vmatpush1.msra.mxu0 0.0
    %105 = vmatprep.subr.mxu0 0.0
    %106 = vmatpush1.msra.mxu0 0.0
    %107 = vmatprep.subr.mxu0 0.0
    %108 = vmatpush1.msra.mxu0 0.0
    %109 = vmatprep.subr.mxu0 0.0
    %110 = vmatpush1.msra.mxu0 0.0
    %111 = vmatprep.subr.mxu0 0.0
    %112 = vmatpush1.msra.mxu0 0.0
    %113 = vmatprep.subr.mxu0 0.0
    %114 = vmatpush1.msra.mxu0 0.0
    %115 = vmatprep.subr.mxu0 0.0
    %116 = vmatpush1.msra.mxu0 0.0
    %117 = vmatprep.subr.mxu0 0.0
    %118 = vmatpush1.msra.mxu0 0.0
    %119 = vmatprep.subr.mxu0 0.0
    %120 = vmatpush1.msra.mxu0 0.0
    %121 = vmatprep.subr.mxu0 0.0
    %122 = vmatpush1.msra.mxu0 %v91
    %123 = vmatprep.subr.mxu0 0.0
    %124 = vmatpush1.msra.mxu0 %v76
    %125 = vmatprep.subr.mxu0 0.0
    %126 = vmatpush2.msra.mxu0 0.0
    %127 = vmatprep.subr.mxu0 0.0
    %128 = vmatpush2.msra.mxu0 0.0
    %129 = vmatprep.subr.mxu0 0.0
    %130 = vmatpush2.msra.mxu0 0.0
    %131 = vmatprep.subr.mxu0 0.0
    %132 = vmatpush2.msra.mxu0 0.0
    %133 = vmatprep.subr.mxu0 0.0
    %134 = vmatpush2.msra.mxu0 0.0
    %135 = vmatprep.subr.mxu0 0.0
    %136 = vmatpush2.msra.mxu0 0.0
    %137 = vmatprep.subr.mxu0 0.0
    %138 = vmatpush2.msra.mxu0 0.0
    %139 = vmatprep.subr.mxu0 0.0
    %140 = vmatpush2.msra.mxu0 0.0
    %141 = vmatprep.subr.mxu0 0.0
    %142 = vmatpush2.msra.mxu0 0.0
    %143 = vmatprep.subr.mxu0 0.0
    %144 = vmatpush2.msra.mxu0 0.0
    %145 = vmatprep.subr.mxu0 0.0
    %146 = vmatpush2.msra.mxu0 0.0
    %147 = vmatprep.subr.mxu0 0.0
    %148 = vmatpush2.msra.mxu0 0.0
    %149 = vmatprep.subr.mxu0 0.0
    %150 = vmatpush2.msra.mxu0 0.0
    %151 = vmatprep.subr.mxu0 0.0
    %152 = vmatpush2.msra.mxu0 0.0
    %153 = vmatprep.subr.mxu0 0.0
    %154 = vmatpush2.msra.mxu0 0.0
    %155 = vmatprep.subr.mxu0 0.0
    %156 = vmatpush2.msra.mxu0 0.0
    %157 = vmatprep.mubr.f32.mxu0 0.0
    %158 = vmatmul.mubr.f32.gmra.mxu0 %v87
    %v159 = vpop.f32.mrf.mxu0
    %v160 = vadd.f32 %v83, %v159
    %v161 = vpop.f32.mrf.mxu0
    %162 = vdwg.mxu0
    %v163 = vmax.f32 %v160, 0.0
    %v164 = vld [vmem:[#allocation7] sm:$0xff]
    %v165 = vld [vmem:[#allocation7 + $0x8] sm:$0xff]
    %v166 = vld [vmem:[#allocation7 + $0x10] sm:$0xff]
    %v167 = vld [vmem:[#allocation7 + $0x18] sm:$0xff]
    %v168 = vld [vmem:[#allocation7 + $0x20] sm:$0xff]
    %v169 = vld [vmem:[#allocation7 + $0x28] sm:$0xff]
    %v170 = vld [vmem:[#allocation7 + $0x30] sm:$0xff]
    %v171 = vld [vmem:[#allocation7 + $0x38] sm:$0xff]
    %v172 = vld [vmem:[#allocation7 + $0x40] sm:$0xff]
    %v173 = vld [vmem:[#allocation7 + $0x48] sm:$0xff]
    %v174 = vld [vmem:[#allocation7 + $0x50] sm:$0xff]
    %v175 = vld [vmem:[#allocation7 + $0x58] sm:$0xff]
    %v176 = vld [vmem:[#allocation7 + $0x60] sm:$0xff]
    %v177 = vld [vmem:[#allocation7 + $0x68] sm:$0xff]
    %v178 = vld [vmem:[#allocation7 + $0x70] sm:$0xff]
    %v179 = vld [vmem:[#allocation7 + $0x78] sm:$0xff]
    %v180 = vld [vmem:[%s4] sm:$0x1]
    %v182 = vlaneseq
    %v183 = vshrl.u32 %v182, 7
    %v184 = vsub.s32 0, %v183
    %v185 = vrot.slane %v180, %v184
    %187 = vmatprep.subr.mxu0 0.0
    %188 = vmatpush1.msra.mxu0 %v179
    %189 = vmatprep.subr.mxu0 0.0
    %190 = vmatpush1.msra.mxu0 %v178
    %191 = vmatprep.subr.mxu0 0.0
    %192 = vmatpush1.msra.mxu0 %v177
    %193 = vmatprep.subr.mxu0 0.0
    %194 = vmatpush1.msra.mxu0 %v176
    %195 = vmatprep.subr.mxu0 0.0
    %196 = vmatpush1.msra.mxu0 %v175
    %197 = vmatprep.subr.mxu0 0.0
    %198 = vmatpush1.msra.mxu0 %v174
    %199 = vmatprep.subr.mxu0 0.0
    %200 = vmatpush1.msra.mxu0 %v173
    %201 = vmatprep.subr.mxu0 0.0
    %202 = vmatpush1.msra.mxu0 %v172
    %203 = vmatprep.subr.mxu0 0.0
    %204 = vmatpush1.msra.mxu0 %v171
    %205 = vmatprep.subr.mxu0 0.0
    %206 = vmatpush1.msra.mxu0 %v170
    %207 = vmatprep.subr.mxu0 0.0
    %208 = vmatpush1.msra.mxu0 %v169
    %209 = vmatprep.subr.mxu0 0.0
    %210 = vmatpush1.msra.mxu0 %v168
    %211 = vmatprep.subr.mxu0 0.0
    %212 = vmatpush1.msra.mxu0 %v167
    %213 = vmatprep.subr.mxu0 0.0
    %214 = vmatpush1.msra.mxu0 %v166
    %215 = vmatprep.subr.mxu0 0.0
    %216 = vmatpush1.msra.mxu0 %v165
    %217 = vmatprep.subr.mxu0 0.0
    %218 = vmatpush1.msra.mxu0 %v164
    %219 = vmatprep.subr.mxu0 0.0
    %220 = vmatpush2.msra.mxu0 0.0
    %221 = vmatprep.subr.mxu0 0.0
    %222 = vmatpush2.msra.mxu0 0.0
    %223 = vmatprep.subr.mxu0 0.0
    %224 = vmatpush2.msra.mxu0 0.0
    %225 = vmatprep.subr.mxu0 0.0
    %226 = vmatpush2.msra.mxu0 0.0
    %227 = vmatprep.subr.mxu0 0.0
    %228 = vmatpush2.msra.mxu0 0.0
    %229 = vmatprep.subr.mxu0 0.0
    %230 = vmatpush2.msra.mxu0 0.0
    %231 = vmatprep.subr.mxu0 0.0
    %232 = vmatpush2.msra.mxu0 0.0
    %233 = vmatprep.subr.mxu0 0.0
    %234 = vmatpush2.msra.mxu0 0.0
    %235 = vmatprep.subr.mxu0 0.0
    %236 = vmatpush2.msra.mxu0 0.0
    %237 = vmatprep.subr.mxu0 0.0
    %238 = vmatpush2.msra.mxu0 0.0
    %239 = vmatprep.subr.mxu0 0.0
    %240 = vmatpush2.msra.mxu0 0.0
    %241 = vmatprep.subr.mxu0 0.0
    %242 = vmatpush2.msra.mxu0 0.0
    %243 = vmatprep.subr.mxu0 0.0
    %244 = vmatpush2.msra.mxu0 0.0
    %245 = vmatprep.subr.mxu0 0.0
    %246 = vmatpush2.msra.mxu0 0.0
    %247 = vmatprep.subr.mxu0 0.0
    %248 = vmatpush2.msra.mxu0 0.0
    %249 = vmatprep.subr.mxu0 0.0
    %250 = vmatpush2.msra.mxu0 0.0
    %251 = vmatprep.mubr.f32.mxu0 0.0
    %252 = vmatmul.mubr.f32.gmra.mxu0 %v163
    %v253 = vpop.f32.mrf.mxu0
    %v254 = vadd.f32 %v185, %v253
    %v255 = vpop.f32.mrf.mxu0
    %256 = vdwg.mxu0
    %257 = vst [vmem:[#allocation8] sm:$0xff] %v254
    %v258 = vld [vmem:[#allocation9] sm:$0x1]
    %v259 = vrot.slane %v254, 4
    %v260 = vadd.f32 %v254, %v259
    %v261 = vrot.slane %v260, 2
    %v262 = vadd.f32 %v260, %v261
    %v263 = vrot.slane %v262, 1
    %v264 = vadd.f32 %v262, %v263
    %v265 = vadd.f32 %v258, %v264
    %266 = vst [vmem:[#allocation9] sm:$0x1] %v265
    %v267 = vld [vmem:[#allocation11] sm:$0x1]
    %v268 = vmul.f32 %v254, %v254
    %v269 = vrot.slane %v268, 4
    %v270 = vadd.f32 %v268, %v269
    %v271 = vrot.slane %v270, 2
    %v272 = vadd.f32 %v270, %v271
    %v273 = vrot.slane %v272, 1
    %v274 = vadd.f32 %v272, %v273
    %v275 = vadd.f32 %v267, %v274
    %276 = vst [vmem:[#allocation11] sm:$0x1] %v275
    // Predicated region
    $region38: #{tpu_custom_call.1} parent=1 // pred_check
      _
    $region39: #{tpu_custom_call.1} parent=1 // pred_check_branch
      %278 = sbr.rel (0) target = $region41
    $region40: #{tpu_custom_call.1} parent=1 // pred_region
      %s279 = sadd.s32 0, 0
      %s281 = ssub.s32 128, 128
      %282 = vsyncadd [#allocation4], %s281
      %s283 = smul.addr %s279, 128
      %s284 = scalar_lea.hbm %s5, %s283
      %s286 = sshll.u32 [#allocation8], 4
      %s287 = int_to_ptr.vmem [resolvable:$true] %s286
      %289 = dma.vmem_to_hbm [thread:$0]  %s287, 128, %s284, [#allocation4]
    $region41: #{tpu_custom_call.1} parent=1 // pred_fallthru
      _
    // Predicated region
    $region42: #{tpu_custom_call.1} parent=1 // pred_check
      _
    $region43: #{tpu_custom_call.1} parent=1 // pred_check_branch
      %291 = sbr.rel (0) target = $region45
    $region44: #{tpu_custom_call.1} parent=1 // pred_region
      %s293 = ssub.s32 16, 16
      %294 = vsyncadd [#allocation10], %s293
      %s296 = sshll.u32 [#allocation9], 4
      %s297 = int_to_ptr.vmem [resolvable:$true] %s296
      %299 = dma.vmem_to_hbm [thread:$0]  %s297, 16, %s6, [#allocation10]
    $region45: #{tpu_custom_call.1} parent=1 // pred_fallthru
      _
    // Predicated region
    $region46: #{tpu_custom_call.1} parent=1 // pred_check
      _
    $region47: #{tpu_custom_call.1} parent=1 // pred_check_branch
      %301 = sbr.rel (0) target = $region49
    $region48: #{tpu_custom_call.1} parent=1 // pred_region
      %s303 = ssub.s32 16, 16
      %304 = vsyncadd [#allocation10], %s303
      %s306 = sshll.u32 [#allocation11], 4
      %s307 = int_to_ptr.vmem [resolvable:$true] %s306
      %309 = dma.vmem_to_hbm [thread:$0]  %s307, 16, %s7, [#allocation10]
    $region49: #{tpu_custom_call.1} parent=1 // pred_fallthru
      _
    // Predicated region
    $region50: #{tpu_custom_call.1} parent=1 // pred_check
      _
    $region51: #{tpu_custom_call.1} parent=1 // pred_check_branch
      %311 = sbr.rel (0) target = $region53
    $region52: #{tpu_custom_call.1} parent=1 // pred_region
      %312 = dma.done [#allocation4], 128
    $region53: #{tpu_custom_call.1} parent=1 // pred_fallthru
      _
    // Predicated region
    $region54: #{tpu_custom_call.1} parent=1 // pred_check
      _
    $region55: #{tpu_custom_call.1} parent=1 // pred_check_branch
      %314 = sbr.rel (0) target = $region57
    $region56: #{tpu_custom_call.1} parent=1 // pred_region
      %315 = dma.done [#allocation10], 16
    $region57: #{tpu_custom_call.1} parent=1 // pred_fallthru
      _
    // Predicated region
    $region58: #{tpu_custom_call.1} parent=1 // pred_check
      _
    $region59: #{tpu_custom_call.1} parent=1 // pred_check_branch
      %317 = sbr.rel (0) target = $region61
    $region60: #{tpu_custom_call.1} parent=1 // pred_region
      %318 = dma.done [#allocation10], 16
    $region61: #{tpu_custom_call.1} parent=1 // pred_fallthru
      _
    %319 = vsyncpa [#allocation3], 1
    %320 = vsyncpa [#allocation6], 1
    %321 = vsyncpa [#allocation4], 1
    %322 = vsyncpa [#allocation10], 1

</llo_original>
